<compile_context>
chip_gen: v5e
topology: v5e:2x2
jax: 0.10.0
libtpu: 0.0.40
codegen_flags: <defaults>
</compile_context>

<pallas_src>
import jax
import jax.numpy as jnp
from jax.experimental import pallas as pl
from jax.experimental.pallas import tpu as pltpu


def mlp_kernel(x_ref, w1_ref, b1_ref, w2_ref, b2_ref, w3_ref, b3_ref, o_ref):
    # relu(x@W1+b1) -> relu(.@W2+b2) -> .@W3+b3, all on the MXU with f32 accum.
    x = x_ref[...]
    h1 = jnp.dot(x, w1_ref[...], preferred_element_type=jnp.float32) + b1_ref[...]
    h1 = jnp.maximum(h1, 0.0).astype(w2_ref.dtype)   # keep MXU in bf16 path
    h2 = jnp.dot(h1, w2_ref[...], preferred_element_type=jnp.float32) + b2_ref[...]
    h2 = jnp.maximum(h2, 0.0).astype(w3_ref.dtype)
    out = jnp.dot(h2, w3_ref[...], preferred_element_type=jnp.float32) + b3_ref[...]
    o_ref[...] = out.astype(o_ref.dtype)


def _round_up8(n):
    return max(8, -(-int(n) // 8) * 8)


def _tpu_topology():
    """(num_tensorcores_per_chip, max_batch_tile) for the local device."""
    try:
        kind = (getattr(jax.devices()[0], "device_kind", "") or "").lower()
    except Exception:  # no devices visible at trace time
        kind = ""
    is_v7 = ("v7" in kind) or ("7x" in kind)
    if is_v7:
        # 2 TCs share 64 MiB VMEM -> smaller per-core tile ceiling.
        return 2, 4096
    # v5e / v6e: 1 TC, 128 MiB VMEM -> bigger single-step tiles are fine.
    return 1, 8192


def _pick_tile_b(B, num_cores, max_tile):
    """Batch tile: multiple of 8 sublanes, sized to amortize per-step overhead."""
    B8 = _round_up8(B)
    if num_cores <= 1:
        # Single TensorCore: the grid is a serial loop; use the biggest tile
        # that fits VMEM so most batches run as ONE grid step.
        return min(B8, max_tile)
    # v7x megacore: only split when the batch is big enough that per-step
    # overhead is amortized; then keep >= 2*num_cores steps so every core
    # gets >= 2 steps and the activation DMA pipelines.
    if B8 <= 512:
        return B8
    tile = -(-B // (2 * num_cores))       # ~4 grid steps
    return min(_round_up8(tile), max_tile)


def prepare_params(params, use_bf16=True):
    """One-time cast of weights to the compute dtype (call once, reuse per step)."""
    wdt = jnp.bfloat16 if use_bf16 else jnp.float32
    return {
        "w1": params["w1"].astype(wdt), "b1": params["b1"].astype(jnp.float32),
        "w2": params["w2"].astype(wdt), "b2": params["b2"].astype(jnp.float32),
        "w3": params["w3"].astype(wdt), "b3": params["b3"].astype(jnp.float32),
    }


def d3g_forward(state, params, *, tile_b=None, use_bf16=True,
                vmem_limit_bytes=48 * 1024 * 1024):
    """Pallas implementation of Model.forward (D3G forward-dynamics MLP).

    state:  [B, state_dim] float32
    params: dict with w1 [S,256], b1 [1,256], w2 [256,256], b2 [1,256],
            w3 [256,S], b3 [1,S]   (weights already transposed vs. PyTorch)
    """
    B, S = state.shape
    H = params["w1"].shape[1]

    num_cores, max_tile = _tpu_topology()
    if tile_b is None:
        tile_b = _pick_tile_b(B, num_cores, max_tile)
    tile_b = _round_up8(tile_b)

    compute_dtype = jnp.bfloat16 if use_bf16 else jnp.float32

    def _as(a, dt):
        return a if a.dtype == dt else a.astype(dt)

    # Only casts when params were NOT pre-cast with prepare_params (no-op otherwise).
    x_c = _as(state, compute_dtype)
    w1 = _as(params["w1"], compute_dtype)
    w2 = _as(params["w2"], compute_dtype)
    w3 = _as(params["w3"], compute_dtype)
    # Biases stay f32: they are added after the f32 accumulation.
    b1 = _as(params["b1"], jnp.float32)
    b2 = _as(params["b2"], jnp.float32)
    b3 = _as(params["b3"], jnp.float32)

    # Ragged grid: no batch padding; Pallas masks the partial last block
    # (safe: no cross-row ops, OOB rows never reach HBM on store).
    grid = (pl.cdiv(B, tile_b),)

    # Constant index_map -> weight blocks are not re-fetched across grid steps.
    const_spec = lambda shape: pl.BlockSpec(shape, lambda i: (0, 0))

    itemsize = lambda a: a.size * a.dtype.itemsize
    cost = pl.CostEstimate(
        flops=2 * B * (S * H + H * H + H * S),
        transcendentals=0,
        bytes_accessed=(itemsize(x_c) + itemsize(w1) + itemsize(w2) + itemsize(w3)
                        + itemsize(b1) + itemsize(b2) + itemsize(b3)
                        + B * S * jnp.dtype(state.dtype).itemsize),
    )

    out = pl.pallas_call(
        mlp_kernel,
        out_shape=jax.ShapeDtypeStruct((B, S), state.dtype),
        grid_spec=pltpu.PrefetchScalarGridSpec(
            num_scalar_prefetch=0,
            grid=grid,
            in_specs=[
                pl.BlockSpec((tile_b, S), lambda i: (i, 0)),  # state tile
                const_spec((S, H)),    # w1
                const_spec((1, H)),    # b1
                const_spec((H, H)),    # w2
                const_spec((1, H)),    # b2
                const_spec((H, S)),    # w3
                const_spec((1, S)),    # b3
            ],
            out_specs=pl.BlockSpec((tile_b, S), lambda i: (i, 0)),
        ),
        compiler_params=pltpu.CompilerParams(
            dimension_semantics=("parallel",),
            vmem_limit_bytes=vmem_limit_bytes,
        ),
        cost_estimate=cost,
    )(x_c, w1, b1, w2, b2, w3, b3)

    return out


def init_params(key, state_dim, hidden=256, dtype=jnp.float32):
    """Deterministic parameter init mimicking nn.Linear's uniform(-1/sqrt(fan_in), +)."""
    ks = jax.random.split(key, 6)

    def linear(kw, kb, fan_in, fan_out):
        bound = 1.0 / jnp.sqrt(fan_in)
        # stored as [fan_in, fan_out] (transposed relative to torch's [out, in])
        w = jax.random.uniform(kw, (fan_in, fan_out), dtype, -bound, bound)
        b = jax.random.uniform(kb, (1, fan_out), dtype, -bound, bound)
        return w, b

    w1, b1 = linear(ks[0], ks[1], state_dim, hidden)
    w2, b2 = linear(ks[2], ks[3], hidden, hidden)
    w3, b3 = linear(ks[4], ks[5], hidden, state_dim)
    return {"w1": w1, "b1": b1, "w2": w2, "b2": b2, "w3": w3, "b3": b3}


def reference_forward(state, p):
    h1 = jnp.maximum(state @ p["w1"] + p["b1"], 0.0)
    h2 = jnp.maximum(h1 @ p["w2"] + p["b2"], 0.0)
    return h2 @ p["w3"] + p["b3"]


if __name__ == "__main__":
    key = jax.random.PRNGKey(0)
    k_state, k_params, k_state2 = jax.random.split(key, 3)

    state_dim = 32
    params = init_params(k_params, state_dim)

    # Test 1: tiny batch, full-precision path (tight tolerance vs reference).
    state = jax.random.normal(k_state, (8, state_dim), jnp.float32)
    out = jax.block_until_ready(d3g_forward(state, params, use_bf16=False))
    ref = reference_forward(state, params)
    assert out.shape == (8, state_dim)
    assert jnp.allclose(out, ref, atol=1e-4, rtol=1e-4), "f32 mismatch vs reference"

    # Test 2: ragged multi-step grid (B=12, tile_b=8 -> partial last block) with
    # pre-cast bf16 weights (no per-call cast) on the bf16 fast path.
    params_bf16 = prepare_params(params, use_bf16=True)
    state2 = jax.random.normal(k_state2, (12, state_dim), jnp.float32)
    out2 = jax.block_until_ready(
        d3g_forward(state2, params_bf16, tile_b=8, use_bf16=True))
    ref2 = reference_forward(state2, params)
    assert out2.shape == (12, state_dim)
    assert jnp.allclose(out2, ref2, atol=5e-2, rtol=5e-2), "bf16 mismatch vs reference"

    # Test 3: default auto-tiling path (single big tile on v5e/v6e, split on v7x).
    out3 = jax.block_until_ready(d3g_forward(state2, params_bf16))
    assert out3.shape == (12, state_dim)
    assert jnp.allclose(out3, ref2, atol=5e-2, rtol=5e-2), "auto-tile mismatch"

    print("KERNEL_OK")
</pallas_src>

<mosaic_0001>
module attributes {stable_mosaic.version = 11 : i64} {
  func.func @mlp_kernel(%arg0: i32, %arg1: memref<8x32xf32, #tpu.memory_space<vmem>>, %arg2: memref<32x256xf32, #tpu.memory_space<vmem>>, %arg3: memref<1x256xf32, #tpu.memory_space<vmem>>, %arg4: memref<256x256xf32, #tpu.memory_space<vmem>>, %arg5: memref<1x256xf32, #tpu.memory_space<vmem>>, %arg6: memref<256x32xf32, #tpu.memory_space<vmem>>, %arg7: memref<1x32xf32, #tpu.memory_space<vmem>>, %arg8: memref<8x32xf32, #tpu.memory_space<vmem>>) attributes {dimension_semantics = [#tpu.dimension_semantics<parallel>], iteration_bounds = array<i64: 1>, scalar_prefetch = 0 : i64, scratch_operands = 0 : i64, tpu.core_type = #tpu.core_type<tc>, window_params = [{transform_indices = @transform_0, window_bounds = array<i64: 8, 32>}, {pipeline_mode = #tpu.pipeline_mode<synchronous>, transform_indices = @transform_1, window_bounds = array<i64: 32, 256>}, {pipeline_mode = #tpu.pipeline_mode<synchronous>, transform_indices = @transform_2, window_bounds = array<i64: 1, 256>}, {pipeline_mode = #tpu.pipeline_mode<synchronous>, transform_indices = @transform_3, window_bounds = array<i64: 256, 256>}, {pipeline_mode = #tpu.pipeline_mode<synchronous>, transform_indices = @transform_4, window_bounds = array<i64: 1, 256>}, {pipeline_mode = #tpu.pipeline_mode<synchronous>, transform_indices = @transform_5, window_bounds = array<i64: 256, 32>}, {pipeline_mode = #tpu.pipeline_mode<synchronous>, transform_indices = @transform_6, window_bounds = array<i64: 1, 32>}, {transform_indices = @transform_7, window_bounds = array<i64: 8, 32>}]} {
    %c0 = arith.constant 0 : index
    %c0_0 = arith.constant 0 : index
    %0 = vector.load %arg1[%c0, %c0_0] : memref<8x32xf32, #tpu.memory_space<vmem>>, vector<8x32xf32>
    %c0_1 = arith.constant 0 : index
    %c0_2 = arith.constant 0 : index
    %1 = vector.load %arg2[%c0_1, %c0_2] : memref<32x256xf32, #tpu.memory_space<vmem>>, vector<32x256xf32>
    %cst = arith.constant dense<0.000000e+00> : vector<8x256xf32>
    %2 = tpu.matmul %0, %1, %cst {dimension_numbers = #tpu.dot_dimension_numbers<[1], [0], [0], [1], [0, 0, 1, 1], [], []>} : vector<8x32xf32>, vector<32x256xf32>, vector<8x256xf32> -> vector<8x256xf32>
    %c0_3 = arith.constant 0 : index
    %c0_4 = arith.constant 0 : index
    %3 = vector.load %arg3[%c0_3, %c0_4] : memref<1x256xf32, #tpu.memory_space<vmem>>, vector<1x256xf32>
    %4 = vector.broadcast %3 : vector<1x256xf32> to vector<8x256xf32>
    %5 = arith.addf %2, %4 : vector<8x256xf32>
    %cst_5 = arith.constant 0.000000e+00 : f32
    %6 = vector.broadcast %cst_5 : f32 to vector<8x256xf32>
    %7 = arith.maximumf %5, %6 : vector<8x256xf32>
    %c0_6 = arith.constant 0 : index
    %c0_7 = arith.constant 0 : index
    %8 = vector.load %arg4[%c0_6, %c0_7] : memref<256x256xf32, #tpu.memory_space<vmem>>, vector<256x256xf32>
    %cst_8 = arith.constant dense<0.000000e+00> : vector<8x256xf32>
    %9 = tpu.matmul %7, %8, %cst_8 {dimension_numbers = #tpu.dot_dimension_numbers<[1], [0], [0], [1], [0, 0, 1, 1], [], []>} : vector<8x256xf32>, vector<256x256xf32>, vector<8x256xf32> -> vector<8x256xf32>
    %c0_9 = arith.constant 0 : index
    %c0_10 = arith.constant 0 : index
    %10 = vector.load %arg5[%c0_9, %c0_10] : memref<1x256xf32, #tpu.memory_space<vmem>>, vector<1x256xf32>
    %11 = vector.broadcast %10 : vector<1x256xf32> to vector<8x256xf32>
    %12 = arith.addf %9, %11 : vector<8x256xf32>
    %cst_11 = arith.constant 0.000000e+00 : f32
    %13 = vector.broadcast %cst_11 : f32 to vector<8x256xf32>
    %14 = arith.maximumf %12, %13 : vector<8x256xf32>
    %c0_12 = arith.constant 0 : index
    %c0_13 = arith.constant 0 : index
    %15 = vector.load %arg6[%c0_12, %c0_13] : memref<256x32xf32, #tpu.memory_space<vmem>>, vector<256x32xf32>
    %cst_14 = arith.constant dense<0.000000e+00> : vector<8x32xf32>
    %16 = tpu.matmul %14, %15, %cst_14 {dimension_numbers = #tpu.dot_dimension_numbers<[1], [0], [0], [1], [0, 0, 1, 1], [], []>} : vector<8x256xf32>, vector<256x32xf32>, vector<8x32xf32> -> vector<8x32xf32>
    %c0_15 = arith.constant 0 : index
    %c0_16 = arith.constant 0 : index
    %17 = vector.load %arg7[%c0_15, %c0_16] : memref<1x32xf32, #tpu.memory_space<vmem>>, vector<1x32xf32>
    %18 = vector.broadcast %17 : vector<1x32xf32> to vector<8x32xf32>
    %19 = arith.addf %16, %18 : vector<8x32xf32>
    %c0_17 = arith.constant 0 : index
    %c0_18 = arith.constant 0 : index
    %20 = vector.load %arg8[%c0_17, %c0_18] : memref<8x32xf32, #tpu.memory_space<vmem>>, vector<8x32xf32>
    tpu.vector_store %arg8[%c0_17, %c0_18], %19 {strides = array<i32>} : memref<8x32xf32, #tpu.memory_space<vmem>>, vector<8x32xf32>,
    return
  }
  func.func @transform_0(%arg0: i32) -> (i32, i32) {
    %c0_i32 = arith.constant 0 : i32
    %c0_i32_0 = arith.constant 0 : i32
    return %arg0, %c0_i32 : i32, i32
  }
  func.func @transform_1(%arg0: i32) -> (i32, i32) {
    %c0_i32 = arith.constant 0 : i32
    %c0_i32_0 = arith.constant 0 : i32
    %c0_i32_1 = arith.constant 0 : i32
    return %c0_i32, %c0_i32_0 : i32, i32
  }
  func.func @transform_2(%arg0: i32) -> (i32, i32) {
    %c0_i32 = arith.constant 0 : i32
    %c0_i32_0 = arith.constant 0 : i32
    %c0_i32_1 = arith.constant 0 : i32
    return %c0_i32, %c0_i32_0 : i32, i32
  }
  func.func @transform_3(%arg0: i32) -> (i32, i32) {
    %c0_i32 = arith.constant 0 : i32
    %c0_i32_0 = arith.constant 0 : i32
    %c0_i32_1 = arith.constant 0 : i32
    return %c0_i32, %c0_i32_0 : i32, i32
  }
  func.func @transform_4(%arg0: i32) -> (i32, i32) {
    %c0_i32 = arith.constant 0 : i32
    %c0_i32_0 = arith.constant 0 : i32
    %c0_i32_1 = arith.constant 0 : i32
    return %c0_i32, %c0_i32_0 : i32, i32
  }
  func.func @transform_5(%arg0: i32) -> (i32, i32) {
    %c0_i32 = arith.constant 0 : i32
    %c0_i32_0 = arith.constant 0 : i32
    %c0_i32_1 = arith.constant 0 : i32
    return %c0_i32, %c0_i32_0 : i32, i32
  }
  func.func @transform_6(%arg0: i32) -> (i32, i32) {
    %c0_i32 = arith.constant 0 : i32
    %c0_i32_0 = arith.constant 0 : i32
    %c0_i32_1 = arith.constant 0 : i32
    return %c0_i32, %c0_i32_0 : i32, i32
  }
  func.func @transform_7(%arg0: i32) -> (i32, i32) {
    %c0_i32 = arith.constant 0 : i32
    %c0_i32_0 = arith.constant 0 : i32
    return %arg0, %c0_i32 : i32, i32
  }
}

</mosaic_0001>

<llo_original>
// kernel: tpu_custom_call.1
$region0: #{tpu_custom_call.1}
  #allocation0 [shape = 'u32[]', space=smem, size = 0x4, offset = 0x4, fixed_abs, tag = 'smem constant byte address 0x4 - core index']
  #allocation1 [shape = 'u32[72,128]{1,0:T(1,128)}', space=vmem, size = 0x9000, scoped, tag = 'internal scratch']
  %s0 = inlined_call_operand.vmem [shape: f32[8,32], index: 0, kind: input, shape index: {}]
  %s1 = inlined_call_operand.vmem [shape: f32[32,256], index: 1, kind: input, shape index: {}]
  %s2 = inlined_call_operand.vmem [shape: f32[1,256], index: 2, kind: input, shape index: {}]
  %s3 = inlined_call_operand.hbm [shape: f32[256,256], index: 3, kind: input, shape index: {}]
  %s4 = inlined_call_operand.vmem [shape: f32[1,256], index: 4, kind: input, shape index: {}]
  %s5 = inlined_call_operand.vmem [shape: f32[256,32], index: 5, kind: input, shape index: {}]
  %s6 = inlined_call_operand.vmem [shape: f32[1,32], index: 6, kind: input, shape index: {}]
  %s7 = inlined_call_operand.hbm [shape: f32[8,32], index: 7, kind: output, shape index: {}]
  %s8 = sld [smem:[#allocation0]]
  $region42: #{tpu_custom_call.1} parent=0
    _
  %s10 = ssub.s32 1, %s8
  %s11 = scalar_select 0, %s10, %s8
  $region1: #{tpu_custom_call.1} parent=0
    #allocation2 [shape = 'u8[262144]{0}', space=vmem, size = 0x40000, scoped, tag = 'input window, operand 3, single buffered']
    #allocation3 [shape = 's32[1]{0}', space=sflag, size = 0x4, scoped, tag = 'scoped memory for tpu_custom_call.1']
    #allocation4 [shape = 's32[1]{0}', space=sflag, size = 0x4, scoped, tag = 'scoped memory for tpu_custom_call.1']
    #allocation5 [shape = 'u8[4096]{0}', space=vmem, size = 0x1000, scoped, tag = 'output window, operand 0, single buffered']
    %12 = vsyncpa [#allocation3], 0
    %13 = vsyncpa [#allocation4], 0
    // Predicated region
    $region2: #{tpu_custom_call.1} parent=1 // pred_check
      _
    $region3: #{tpu_custom_call.1} parent=1 // pred_check_branch
      %15 = sbr.rel (0) target = $region5
    $region4: #{tpu_custom_call.1} parent=1 // pred_region
      _
    $region5: #{tpu_custom_call.1} parent=1 // pred_fallthru
      _
    // Predicated region
    $region6: #{tpu_custom_call.1} parent=1 // pred_check
      _
    $region7: #{tpu_custom_call.1} parent=1 // pred_check_branch
      %17 = sbr.rel (0) target = $region9
    $region8: #{tpu_custom_call.1} parent=1 // pred_region
      _
    $region9: #{tpu_custom_call.1} parent=1 // pred_fallthru
      _
    // Predicated region
    $region10: #{tpu_custom_call.1} parent=1 // pred_check
      _
    $region11: #{tpu_custom_call.1} parent=1 // pred_check_branch
      %19 = sbr.rel (0) target = $region13
    $region12: #{tpu_custom_call.1} parent=1 // pred_region
      _
    $region13: #{tpu_custom_call.1} parent=1 // pred_fallthru
      _
    // Predicated region
    $region14: #{tpu_custom_call.1} parent=1 // pred_check
      _
    $region15: #{tpu_custom_call.1} parent=1 // pred_check_branch
      %21 = sbr.rel (0) target = $region17
    $region16: #{tpu_custom_call.1} parent=1 // pred_region
      %23 = vsyncadd [#allocation3], 0
      %s24 = sshll.u32 %s3, 4
      %s25 = int_to_ptr.hbm [resolvable:$true] %s24
      %s26 = sshll.u32 [#allocation2], 4
      %s27 = int_to_ptr.vmem [resolvable:$true] %s26
      %32 = dma.hbm_to_vmem [thread:$0]  %s25, 8192, %s27, [#allocation3], 256, 256, 16
    $region17: #{tpu_custom_call.1} parent=1 // pred_fallthru
      _
    // Predicated region
    $region18: #{tpu_custom_call.1} parent=1 // pred_check
      _
    $region19: #{tpu_custom_call.1} parent=1 // pred_check_branch
      %34 = sbr.rel (0) target = $region21
    $region20: #{tpu_custom_call.1} parent=1 // pred_region
      _
    $region21: #{tpu_custom_call.1} parent=1 // pred_fallthru
      _
    // Predicated region
    $region22: #{tpu_custom_call.1} parent=1 // pred_check
      _
    $region23: #{tpu_custom_call.1} parent=1 // pred_check_branch
      %36 = sbr.rel (0) target = $region25
    $region24: #{tpu_custom_call.1} parent=1 // pred_region
      _
    $region25: #{tpu_custom_call.1} parent=1 // pred_fallthru
      _
    // Predicated region
    $region26: #{tpu_custom_call.1} parent=1 // pred_check
      _
    $region27: #{tpu_custom_call.1} parent=1 // pred_check_branch
      %38 = sbr.rel (0) target = $region29
    $region28: #{tpu_custom_call.1} parent=1 // pred_region
      _
    $region29: #{tpu_custom_call.1} parent=1 // pred_fallthru
      _
    // Predicated region
    $region30: #{tpu_custom_call.1} parent=1 // pred_check
      _
    $region31: #{tpu_custom_call.1} parent=1 // pred_check_branch
      %40 = sbr.rel (0) target = $region33
    $region32: #{tpu_custom_call.1} parent=1 // pred_region
      %42 = dma.done [#allocation3], 8192
    $region33: #{tpu_custom_call.1} parent=1 // pred_fallthru
      _
    %v43 = vld [vmem:[%s0] sm:$0xff]
    %v44 = vld [vmem:[%s1] sm:$0xff]
    %v45 = vld [vmem:[%s1 + $0x8] sm:$0xff]
    %v46 = vld [vmem:[%s1 + $0x10] sm:$0xff]
    %v47 = vld [vmem:[%s1 + $0x18] sm:$0xff]
    %v48 = vld [vmem:[%s1 + $0x20] sm:$0xff]
    %v49 = vld [vmem:[%s1 + $0x28] sm:$0xff]
    %v50 = vld [vmem:[%s1 + $0x30] sm:$0xff]
    %v51 = vld [vmem:[%s1 + $0x38] sm:$0xff]
    %v52 = vld [vmem:[%s2] sm:$0x3]
    %v54 = vperm.slane %v52, 0
    %v55 = vperm.slane %v52, 1
    %vm58 = vcmask 261120
    %v60 = vsel %vm58, %v43, 0
    %62 = vmatpush.msra.mxu0 0.0
    %63 = vmatpush.msra.mxu0 0.0
    %64 = vmatpush.msra.mxu0 0.0
    %65 = vmatpush.msra.mxu0 0.0
    %66 = vmatpush.msra.mxu0 0.0
    %67 = vmatpush.msra.mxu0 0.0
    %68 = vmatpush.msra.mxu0 0.0
    %69 = vmatpush.msra.mxu0 0.0
    %70 = vmatpush.msra.mxu0 0.0
    %71 = vmatpush.msra.mxu0 0.0
    %72 = vmatpush.msra.mxu0 0.0
    %73 = vmatpush.msra.mxu0 0.0
    %74 = vmatpush.msra.mxu0 %v50
    %75 = vmatpush.msra.mxu0 %v48
    %76 = vmatpush.msra.mxu0 %v46
    %77 = vmatpush.msra.mxu0 %v44
    %78 = vmatmul.f32.gmra.mxu0 %v60
    %v79 = vpop.f32.mrf.mxu0
    %v80 = vadd.f32 %v54, %v79
    %81 = vdwg.mxu0
    %82 = vmatpush.msra.mxu0 0.0
    %83 = vmatpush.msra.mxu0 0.0
    %84 = vmatpush.msra.mxu0 0.0
    %85 = vmatpush.msra.mxu0 0.0
    %86 = vmatpush.msra.mxu0 0.0
    %87 = vmatpush.msra.mxu0 0.0
    %88 = vmatpush.msra.mxu0 0.0
    %89 = vmatpush.msra.mxu0 0.0
    %90 = vmatpush.msra.mxu0 0.0
    %91 = vmatpush.msra.mxu0 0.0
    %92 = vmatpush.msra.mxu0 0.0
    %93 = vmatpush.msra.mxu0 0.0
    %94 = vmatpush.msra.mxu0 %v51
    %95 = vmatpush.msra.mxu0 %v49
    %96 = vmatpush.msra.mxu0 %v47
    %97 = vmatpush.msra.mxu0 %v45
    %98 = vmatmul.f32.gmra.mxu0 %v60
    %v99 = vpop.f32.mrf.mxu0
    %v100 = vadd.f32 %v55, %v99
    %101 = vdwg.mxu0
    %v102 = vmax.f32 %v80, 0.0
    %v103 = vmax.f32 %v100, 0.0
    %v104 = vld [vmem:[#allocation2] sm:$0xff]
    %v105 = vld [vmem:[#allocation2 + $0x8] sm:$0xff]
    %v106 = vld [vmem:[#allocation2 + $0x10] sm:$0xff]
    %v107 = vld [vmem:[#allocation2 + $0x18] sm:$0xff]
    %v108 = vld [vmem:[#allocation2 + $0x20] sm:$0xff]
    %v109 = vld [vmem:[#allocation2 + $0x28] sm:$0xff]
    %v110 = vld [vmem:[#allocation2 + $0x30] sm:$0xff]
    %v111 = vld [vmem:[#allocation2 + $0x38] sm:$0xff]
    %v112 = vld [vmem:[#allocation2 + $0x40] sm:$0xff]
    %v113 = vld [vmem:[#allocation2 + $0x48] sm:$0xff]
    %v114 = vld [vmem:[#allocation2 + $0x50] sm:$0xff]
    %v115 = vld [vmem:[#allocation2 + $0x58] sm:$0xff]
    %v116 = vld [vmem:[#allocation2 + $0x60] sm:$0xff]
    %v117 = vld [vmem:[#allocation2 + $0x68] sm:$0xff]
    %v118 = vld [vmem:[#allocation2 + $0x70] sm:$0xff]
    %v119 = vld [vmem:[#allocation2 + $0x78] sm:$0xff]
    %v120 = vld [vmem:[#allocation2 + $0x80] sm:$0xff]
    %v121 = vld [vmem:[#allocation2 + $0x88] sm:$0xff]
    %v122 = vld [vmem:[#allocation2 + $0x90] sm:$0xff]
    %v123 = vld [vmem:[#allocation2 + $0x98] sm:$0xff]
    %v124 = vld [vmem:[#allocation2 + $0xa0] sm:$0xff]
    %v125 = vld [vmem:[#allocation2 + $0xa8] sm:$0xff]
    %v126 = vld [vmem:[#allocation2 + $0xb0] sm:$0xff]
    %v127 = vld [vmem:[#allocation2 + $0xb8] sm:$0xff]
    %v128 = vld [vmem:[#allocation2 + $0xc0] sm:$0xff]
    %v129 = vld [vmem:[#allocation2 + $0xc8] sm:$0xff]
    %v130 = vld [vmem:[#allocation2 + $0xd0] sm:$0xff]
    %v131 = vld [vmem:[#allocation2 + $0xd8] sm:$0xff]
    %v132 = vld [vmem:[#allocation2 + $0xe0] sm:$0xff]
    %v133 = vld [vmem:[#allocation2 + $0xe8] sm:$0xff]
    %v134 = vld [vmem:[#allocation2 + $0xf0] sm:$0xff]
    %v135 = vld [vmem:[#allocation2 + $0xf8] sm:$0xff]
    %v136 = vld [vmem:[#allocation2 + $0x100] sm:$0xff]
    %v137 = vld [vmem:[#allocation2 + $0x108] sm:$0xff]
    %v138 = vld [vmem:[#allocation2 + $0x110] sm:$0xff]
    %v139 = vld [vmem:[#allocation2 + $0x118] sm:$0xff]
    %v140 = vld [vmem:[#allocation2 + $0x120] sm:$0xff]
    %v141 = vld [vmem:[#allocation2 + $0x128] sm:$0xff]
    %v142 = vld [vmem:[#allocation2 + $0x130] sm:$0xff]
    %v143 = vld [vmem:[#allocation2 + $0x138] sm:$0xff]
    %v144 = vld [vmem:[#allocation2 + $0x140] sm:$0xff]
    %v145 = vld [vmem:[#allocation2 + $0x148] sm:$0xff]
    %v146 = vld [vmem:[#allocation2 + $0x150] sm:$0xff]
    %v147 = vld [vmem:[#allocation2 + $0x158] sm:$0xff]
    %v148 = vld [vmem:[#allocation2 + $0x160] sm:$0xff]
    %v149 = vld [vmem:[#allocation2 + $0x168] sm:$0xff]
    %v150 = vld [vmem:[#allocation2 + $0x170] sm:$0xff]
    %v151 = vld [vmem:[#allocation2 + $0x178] sm:$0xff]
    %v152 = vld [vmem:[#allocation2 + $0x180] sm:$0xff]
    %v153 = vld [vmem:[#allocation2 + $0x188] sm:$0xff]
    %v154 = vld [vmem:[#allocation2 + $0x190] sm:$0xff]
    %v155 = vld [vmem:[#allocation2 + $0x198] sm:$0xff]
    %v156 = vld [vmem:[#allocation2 + $0x1a0] sm:$0xff]
    %v157 = vld [vmem:[#allocation2 + $0x1a8] sm:$0xff]
    %v158 = vld [vmem:[#allocation2 + $0x1b0] sm:$0xff]
    %v159 = vld [vmem:[#allocation2 + $0x1b8] sm:$0xff]
    %v160 = vld [vmem:[#allocation2 + $0x1c0] sm:$0xff]
    %v161 = vld [vmem:[#allocation2 + $0x1c8] sm:$0xff]
    %v162 = vld [vmem:[#allocation2 + $0x1d0] sm:$0xff]
    %v163 = vld [vmem:[#allocation2 + $0x1d8] sm:$0xff]
    %v164 = vld [vmem:[#allocation2 + $0x1e0] sm:$0xff]
    %v165 = vld [vmem:[#allocation2 + $0x1e8] sm:$0xff]
    %v166 = vld [vmem:[#allocation2 + $0x1f0] sm:$0xff]
    %v167 = vld [vmem:[#allocation2 + $0x1f8] sm:$0xff]
    %v168 = vld [vmem:[%s4] sm:$0x3]
    %v170 = vperm.slane %v168, 0
    %v171 = vperm.slane %v168, 1
    %174 = vmatpush.msra.mxu0 %v134
    %175 = vmatpush.msra.mxu0 %v132
    %176 = vmatpush.msra.mxu0 %v130
    %177 = vmatpush.msra.mxu0 %v128
    %178 = vmatpush.msra.mxu0 %v126
    %179 = vmatpush.msra.mxu0 %v124
    %180 = vmatpush.msra.mxu0 %v122
    %181 = vmatpush.msra.mxu0 %v120
    %182 = vmatpush.msra.mxu0 %v118
    %183 = vmatpush.msra.mxu0 %v116
    %184 = vmatpush.msra.mxu0 %v114
    %185 = vmatpush.msra.mxu0 %v112
    %186 = vmatpush.msra.mxu0 %v110
    %187 = vmatpush.msra.mxu0 %v108
    %188 = vmatpush.msra.mxu0 %v106
    %189 = vmatpush.msra.mxu0 %v104
    %190 = vmatmul.f32.gmra.mxu0 %v102
    %v191 = vpop.f32.mrf.mxu0
    %v192 = vadd.f32 %v170, %v191
    %193 = vdwg.mxu0
    %194 = vmatpush.msra.mxu0 %v166
    %195 = vmatpush.msra.mxu0 %v164
    %196 = vmatpush.msra.mxu0 %v162
    %197 = vmatpush.msra.mxu0 %v160
    %198 = vmatpush.msra.mxu0 %v158
    %199 = vmatpush.msra.mxu0 %v156
    %200 = vmatpush.msra.mxu0 %v154
    %201 = vmatpush.msra.mxu0 %v152
    %202 = vmatpush.msra.mxu0 %v150
    %203 = vmatpush.msra.mxu0 %v148
    %204 = vmatpush.msra.mxu0 %v146
    %205 = vmatpush.msra.mxu0 %v144
    %206 = vmatpush.msra.mxu0 %v142
    %207 = vmatpush.msra.mxu0 %v140
    %208 = vmatpush.msra.mxu0 %v138
    %209 = vmatpush.msra.mxu0 %v136
    %210 = vmatmul.f32.gmra.mxu0 %v103
    %v211 = vpop.f32.mrf.mxu0
    %v212 = vadd.f32 %v192, %v211
    %213 = vdwg.mxu0
    %214 = vmatpush.msra.mxu0 %v135
    %215 = vmatpush.msra.mxu0 %v133
    %216 = vmatpush.msra.mxu0 %v131
    %217 = vmatpush.msra.mxu0 %v129
    %218 = vmatpush.msra.mxu0 %v127
    %219 = vmatpush.msra.mxu0 %v125
    %220 = vmatpush.msra.mxu0 %v123
    %221 = vmatpush.msra.mxu0 %v121
    %222 = vmatpush.msra.mxu0 %v119
    %223 = vmatpush.msra.mxu0 %v117
    %224 = vmatpush.msra.mxu0 %v115
    %225 = vmatpush.msra.mxu0 %v113
    %226 = vmatpush.msra.mxu0 %v111
    %227 = vmatpush.msra.mxu0 %v109
    %228 = vmatpush.msra.mxu0 %v107
    %229 = vmatpush.msra.mxu0 %v105
    %230 = vmatmul.f32.gmra.mxu0 %v102
    %v231 = vpop.f32.mrf.mxu0
    %v232 = vadd.f32 %v171, %v231
    %233 = vdwg.mxu0
    %234 = vmatpush.msra.mxu0 %v167
    %235 = vmatpush.msra.mxu0 %v165
    %236 = vmatpush.msra.mxu0 %v163
    %237 = vmatpush.msra.mxu0 %v161
    %238 = vmatpush.msra.mxu0 %v159
    %239 = vmatpush.msra.mxu0 %v157
    %240 = vmatpush.msra.mxu0 %v155
    %241 = vmatpush.msra.mxu0 %v153
    %242 = vmatpush.msra.mxu0 %v151
    %243 = vmatpush.msra.mxu0 %v149
    %244 = vmatpush.msra.mxu0 %v147
    %245 = vmatpush.msra.mxu0 %v145
    %246 = vmatpush.msra.mxu0 %v143
    %247 = vmatpush.msra.mxu0 %v141
    %248 = vmatpush.msra.mxu0 %v139
    %249 = vmatpush.msra.mxu0 %v137
    %250 = vmatmul.f32.gmra.mxu0 %v103
    %v251 = vpop.f32.mrf.mxu0
    %v252 = vadd.f32 %v232, %v251
    %253 = vdwg.mxu0
    %v254 = vmax.f32 %v212, 0.0
    %v255 = vmax.f32 %v252, 0.0
    %v256 = vld [vmem:[%s5] sm:$0xff]
    %v257 = vld [vmem:[%s5 + $0x8] sm:$0xff]
    %v258 = vld [vmem:[%s5 + $0x10] sm:$0xff]
    %v259 = vld [vmem:[%s5 + $0x18] sm:$0xff]
    %v260 = vld [vmem:[%s5 + $0x20] sm:$0xff]
    %v261 = vld [vmem:[%s5 + $0x28] sm:$0xff]
    %v262 = vld [vmem:[%s5 + $0x30] sm:$0xff]
    %v263 = vld [vmem:[%s5 + $0x38] sm:$0xff]
    %v264 = vld [vmem:[%s5 + $0x40] sm:$0xff]
    %v265 = vld [vmem:[%s5 + $0x48] sm:$0xff]
    %v266 = vld [vmem:[%s5 + $0x50] sm:$0xff]
    %v267 = vld [vmem:[%s5 + $0x58] sm:$0xff]
    %v268 = vld [vmem:[%s5 + $0x60] sm:$0xff]
    %v269 = vld [vmem:[%s5 + $0x68] sm:$0xff]
    %v270 = vld [vmem:[%s5 + $0x70] sm:$0xff]
    %v271 = vld [vmem:[%s5 + $0x78] sm:$0xff]
    %v272 = vld [vmem:[%s5 + $0x80] sm:$0xff]
    %v273 = vld [vmem:[%s5 + $0x88] sm:$0xff]
    %v274 = vld [vmem:[%s5 + $0x90] sm:$0xff]
    %v275 = vld [vmem:[%s5 + $0x98] sm:$0xff]
    %v276 = vld [vmem:[%s5 + $0xa0] sm:$0xff]
    %v277 = vld [vmem:[%s5 + $0xa8] sm:$0xff]
    %v278 = vld [vmem:[%s5 + $0xb0] sm:$0xff]
    %v279 = vld [vmem:[%s5 + $0xb8] sm:$0xff]
    %v280 = vld [vmem:[%s5 + $0xc0] sm:$0xff]
    %v281 = vld [vmem:[%s5 + $0xc8] sm:$0xff]
    %v282 = vld [vmem:[%s5 + $0xd0] sm:$0xff]
    %v283 = vld [vmem:[%s5 + $0xd8] sm:$0xff]
    %v284 = vld [vmem:[%s5 + $0xe0] sm:$0xff]
    %v285 = vld [vmem:[%s5 + $0xe8] sm:$0xff]
    %v286 = vld [vmem:[%s5 + $0xf0] sm:$0xff]
    %v287 = vld [vmem:[%s5 + $0xf8] sm:$0xff]
    %v288 = vld [vmem:[%s6] sm:$0x1]
    %v290 = vperm.slane %v288, 0
    %292 = vmatpush.msra.mxu0 %v271
    %293 = vmatpush.msra.mxu0 %v270
    %294 = vmatpush.msra.mxu0 %v269
    %295 = vmatpush.msra.mxu0 %v268
    %296 = vmatpush.msra.mxu0 %v267
    %297 = vmatpush.msra.mxu0 %v266
    %298 = vmatpush.msra.mxu0 %v265
    %299 = vmatpush.msra.mxu0 %v264
    %300 = vmatpush.msra.mxu0 %v263
    %301 = vmatpush.msra.mxu0 %v262
    %302 = vmatpush.msra.mxu0 %v261
    %303 = vmatpush.msra.mxu0 %v260
    %304 = vmatpush.msra.mxu0 %v259
    %305 = vmatpush.msra.mxu0 %v258
    %306 = vmatpush.msra.mxu0 %v257
    %307 = vmatpush.msra.mxu0 %v256
    %308 = vmatmul.f32.gmra.mxu0 %v254
    %v309 = vpop.f32.mrf.mxu0
    %v310 = vadd.f32 %v290, %v309
    %311 = vdwg.mxu0
    %312 = vmatpush.msra.mxu0 %v287
    %313 = vmatpush.msra.mxu0 %v286
    %314 = vmatpush.msra.mxu0 %v285
    %315 = vmatpush.msra.mxu0 %v284
    %316 = vmatpush.msra.mxu0 %v283
    %317 = vmatpush.msra.mxu0 %v282
    %318 = vmatpush.msra.mxu0 %v281
    %319 = vmatpush.msra.mxu0 %v280
    %320 = vmatpush.msra.mxu0 %v279
    %321 = vmatpush.msra.mxu0 %v278
    %322 = vmatpush.msra.mxu0 %v277
    %323 = vmatpush.msra.mxu0 %v276
    %324 = vmatpush.msra.mxu0 %v275
    %325 = vmatpush.msra.mxu0 %v274
    %326 = vmatpush.msra.mxu0 %v273
    %327 = vmatpush.msra.mxu0 %v272
    %328 = vmatmul.f32.gmra.mxu0 %v255
    %v329 = vpop.f32.mrf.mxu0
    %v330 = vadd.f32 %v310, %v329
    %331 = vdwg.mxu0
    %332 = vst.msk [vmem:[#allocation5] sm:$0xff] %vm58, %v330
    // Predicated region
    $region34: #{tpu_custom_call.1} parent=1 // pred_check
      _
    $region35: #{tpu_custom_call.1} parent=1 // pred_check_branch
      %334 = sbr.rel (0) target = $region37
    $region36: #{tpu_custom_call.1} parent=1 // pred_region
      %336 = vsyncadd [#allocation4], 0
      %s338 = sshll.u32 [#allocation5], 4
      %s339 = int_to_ptr.vmem [resolvable:$true] %s338
      %s340 = sshll.u32 %s7, 4
      %s341 = int_to_ptr.hbm [resolvable:$true] %s340
      %343 = dma.vmem_to_hbm [thread:$0]  %s339, 128, %s341, [#allocation4]
    $region37: #{tpu_custom_call.1} parent=1 // pred_fallthru
      _
    // Predicated region
    $region38: #{tpu_custom_call.1} parent=1 // pred_check
      _
    $region39: #{tpu_custom_call.1} parent=1 // pred_check_branch
      %345 = sbr.rel (0) target = $region41
    $region40: #{tpu_custom_call.1} parent=1 // pred_region
      %347 = dma.done [#allocation4], 128
    $region41: #{tpu_custom_call.1} parent=1 // pred_fallthru
      _
    %348 = vsyncpa [#allocation3], 1
    %349 = vsyncpa [#allocation4], 1

</llo_original>
